<compile_context>
chip_gen: v7x
topology: tpu7x:2x2x1
jax: 0.10.0
libtpu: 0.0.40
codegen_flags: <defaults>
</compile_context>

<pallas_src>
import functools

import jax
import jax.numpy as jnp
from jax.experimental import pallas as pl
from jax.experimental.pallas import tpu as pltpu

LANE = 128  # vreg lane width / MXU tile width


def _round_up(n, m):
    return ((n + m - 1) // m) * m


def _actor_kernel(x_ref, w1_ref, b1_ref, w2_ref, b2_ref, w3_ref, b3_ref, o_ref):
    """One TB-row tile of the fused 3-layer MLP; everything already padded
    to 128-wide feature dims so each jnp.dot is a clean full-tile MXU op."""
    x = x_ref[...]

    h1 = jnp.dot(x, w1_ref[...], preferred_element_type=jnp.float32) + b1_ref[...]
    h1 = jnp.maximum(h1, 0.0)                         # ReLU

    h2 = jnp.dot(h1, w2_ref[...], preferred_element_type=jnp.float32) + b2_ref[...]
    h2 = jnp.maximum(h2, 0.0)                         # ReLU

    h3 = jnp.dot(h2, w3_ref[...], preferred_element_type=jnp.float32) + b3_ref[...]
    o_ref[...] = jnp.tanh(h3).astype(o_ref.dtype)     # tanh


def _pad2d(a, rows, cols):
    """Zero-pad a 2-D array up to (rows, cols)."""
    return jnp.pad(a, ((0, rows - a.shape[0]), (0, cols - a.shape[1])))


@functools.partial(jax.jit, static_argnames=("block_b",))
def actor_forward(x, params, *, block_b=256):
    """x: (B, in_dims) float32.  params: dict of W1,b1,W2,b2,W3,b3
    (weights stored (in_features, out_features), biases (1, out_features))."""
    B, in_dims = x.shape
    hidden = params["W1"].shape[1]
    out_dims = params["W3"].shape[1]

    # Padded (lane-dense) dims.
    in_p = _round_up(in_dims, LANE)
    hid_p = _round_up(hidden, LANE)
    out_p = _round_up(out_dims, LANE)
    b_pad = _round_up(max(B, 1), block_b)

    # Zero-pad operands (exact through matmul + bias + ReLU).
    x_p = _pad2d(x, b_pad, in_p)
    w1 = _pad2d(params["W1"], in_p, hid_p)
    b1 = _pad2d(params["b1"], 1, hid_p)
    w2 = _pad2d(params["W2"], hid_p, hid_p)
    b2 = _pad2d(params["b2"], 1, hid_p)
    w3 = _pad2d(params["W3"], hid_p, out_p)
    b3 = _pad2d(params["b3"], 1, out_p)

    grid = (b_pad // block_b,)

    # x / out stream per-step; weights & biases use constant block indices so
    # Pallas DMAs them once and keeps them resident in VMEM across the grid.
    in_specs = [
        pl.BlockSpec((block_b, in_p), lambda i: (i, 0)),   # x tile
        pl.BlockSpec((in_p, hid_p), lambda i: (0, 0)),     # W1 (resident)
        pl.BlockSpec((1, hid_p), lambda i: (0, 0)),        # b1
        pl.BlockSpec((hid_p, hid_p), lambda i: (0, 0)),    # W2
        pl.BlockSpec((1, hid_p), lambda i: (0, 0)),        # b2
        pl.BlockSpec((hid_p, out_p), lambda i: (0, 0)),    # W3
        pl.BlockSpec((1, out_p), lambda i: (0, 0)),        # b3
    ]
    out_spec = pl.BlockSpec((block_b, out_p), lambda i: (i, 0))

    flops = 2 * b_pad * (in_p * hid_p + hid_p * hid_p + hid_p * out_p)
    bytes_accessed = 4 * (
        b_pad * in_p + b_pad * out_p                      # streamed x / out
        + in_p * hid_p + hid_p * hid_p + hid_p * out_p    # weights (once)
        + 2 * hid_p + out_p                               # biases
    )

    out_padded = pl.pallas_call(
        _actor_kernel,
        out_shape=jax.ShapeDtypeStruct((b_pad, out_p), jnp.float32),
        grid=grid,
        in_specs=in_specs,
        out_specs=out_spec,
        compiler_params=pltpu.CompilerParams(
            dimension_semantics=("parallel",),
        ),
        cost_estimate=pl.CostEstimate(
            flops=flops,
            transcendentals=b_pad * out_p,
            bytes_accessed=bytes_accessed,
        ),
    )(x_p, w1, b1, w2, b2, w3, b3)

    # Slice away batch + feature padding.
    return out_padded[:B, :out_dims]


def init_actor_params(key, in_dims, out_dims, hidden=64):
    """Deterministic init mimicking torch.nn.Linear default:
    U(-1/sqrt(fan_in), 1/sqrt(fan_in)) for both weight and bias."""
    ks = jax.random.split(key, 6)

    def linear(kw, kb, fan_in, fan_out):
        bound = 1.0 / jnp.sqrt(jnp.float32(fan_in))
        W = jax.random.uniform(kw, (fan_in, fan_out), jnp.float32, -bound, bound)
        b = jax.random.uniform(kb, (1, fan_out), jnp.float32, -bound, bound)
        return W, b

    W1, b1 = linear(ks[0], ks[1], in_dims, hidden)
    W2, b2 = linear(ks[2], ks[3], hidden, hidden)
    W3, b3 = linear(ks[4], ks[5], hidden, out_dims)
    return {"W1": W1, "b1": b1, "W2": W2, "b2": b2, "W3": W3, "b3": b3}


if __name__ == "__main__":
    key = jax.random.PRNGKey(0)
    k_x, k_p = jax.random.split(key)

    batch, in_dims, out_dims = 8, 16, 8
    x = jax.random.normal(k_x, (batch, in_dims), dtype=jnp.float32)
    params = init_actor_params(k_p, in_dims, out_dims)

    out = actor_forward(x, params)
    out = jax.block_until_ready(out)

    # Pure-JAX reference check (same math, no Pallas, no padding).
    ref = jnp.maximum(x @ params["W1"] + params["b1"], 0.0)
    ref = jnp.maximum(ref @ params["W2"] + params["b2"], 0.0)
    ref = jnp.tanh(ref @ params["W3"] + params["b3"])

    assert out.shape == (batch, out_dims), out.shape
    assert jnp.allclose(out, ref, atol=1e-5), "mismatch vs reference"

    print("KERNEL_OK")
</pallas_src>

<mosaic_0001>
module attributes {stable_mosaic.version = 11 : i64} {
  func.func @_actor_kernel(%arg0: i32, %arg1: memref<256x128xf32, #tpu.memory_space<vmem>>, %arg2: memref<128x128xf32, #tpu.memory_space<vmem>>, %arg3: memref<1x128xf32, #tpu.memory_space<vmem>>, %arg4: memref<128x128xf32, #tpu.memory_space<vmem>>, %arg5: memref<1x128xf32, #tpu.memory_space<vmem>>, %arg6: memref<128x128xf32, #tpu.memory_space<vmem>>, %arg7: memref<1x128xf32, #tpu.memory_space<vmem>>, %arg8: memref<256x128xf32, #tpu.memory_space<vmem>>) attributes {dimension_semantics = [#tpu.dimension_semantics<parallel>], iteration_bounds = array<i64: 1>, scalar_prefetch = 0 : i64, scratch_operands = 0 : i64, tpu.core_type = #tpu.core_type<tc>, window_params = [{transform_indices = @transform_0, window_bounds = array<i64: 256, 128>}, {pipeline_mode = #tpu.pipeline_mode<synchronous>, transform_indices = @transform_1, window_bounds = array<i64: 128, 128>}, {pipeline_mode = #tpu.pipeline_mode<synchronous>, transform_indices = @transform_2, window_bounds = array<i64: 1, 128>}, {pipeline_mode = #tpu.pipeline_mode<synchronous>, transform_indices = @transform_3, window_bounds = array<i64: 128, 128>}, {pipeline_mode = #tpu.pipeline_mode<synchronous>, transform_indices = @transform_4, window_bounds = array<i64: 1, 128>}, {pipeline_mode = #tpu.pipeline_mode<synchronous>, transform_indices = @transform_5, window_bounds = array<i64: 128, 128>}, {pipeline_mode = #tpu.pipeline_mode<synchronous>, transform_indices = @transform_6, window_bounds = array<i64: 1, 128>}, {transform_indices = @transform_7, window_bounds = array<i64: 256, 128>}]} {
    %c0 = arith.constant 0 : index
    %c0_0 = arith.constant 0 : index
    %0 = vector.load %arg1[%c0, %c0_0] : memref<256x128xf32, #tpu.memory_space<vmem>>, vector<256x128xf32>
    %c0_1 = arith.constant 0 : index
    %c0_2 = arith.constant 0 : index
    %1 = vector.load %arg2[%c0_1, %c0_2] : memref<128x128xf32, #tpu.memory_space<vmem>>, vector<128x128xf32>
    %cst = arith.constant dense<0.000000e+00> : vector<256x128xf32>
    %2 = tpu.matmul %0, %1, %cst {dimension_numbers = #tpu.dot_dimension_numbers<[1], [0], [0], [1], [0, 0, 1, 1], [], []>} : vector<256x128xf32>, vector<128x128xf32>, vector<256x128xf32> -> vector<256x128xf32>
    %c0_3 = arith.constant 0 : index
    %c0_4 = arith.constant 0 : index
    %3 = vector.load %arg3[%c0_3, %c0_4] : memref<1x128xf32, #tpu.memory_space<vmem>>, vector<1x128xf32>
    %4 = vector.broadcast %3 : vector<1x128xf32> to vector<256x128xf32>
    %5 = arith.addf %2, %4 : vector<256x128xf32>
    %cst_5 = arith.constant 0.000000e+00 : f32
    %6 = vector.broadcast %cst_5 : f32 to vector<256x128xf32>
    %7 = arith.maximumf %5, %6 : vector<256x128xf32>
    %c0_6 = arith.constant 0 : index
    %c0_7 = arith.constant 0 : index
    %8 = vector.load %arg4[%c0_6, %c0_7] : memref<128x128xf32, #tpu.memory_space<vmem>>, vector<128x128xf32>
    %cst_8 = arith.constant dense<0.000000e+00> : vector<256x128xf32>
    %9 = tpu.matmul %7, %8, %cst_8 {dimension_numbers = #tpu.dot_dimension_numbers<[1], [0], [0], [1], [0, 0, 1, 1], [], []>} : vector<256x128xf32>, vector<128x128xf32>, vector<256x128xf32> -> vector<256x128xf32>
    %c0_9 = arith.constant 0 : index
    %c0_10 = arith.constant 0 : index
    %10 = vector.load %arg5[%c0_9, %c0_10] : memref<1x128xf32, #tpu.memory_space<vmem>>, vector<1x128xf32>
    %11 = vector.broadcast %10 : vector<1x128xf32> to vector<256x128xf32>
    %12 = arith.addf %9, %11 : vector<256x128xf32>
    %cst_11 = arith.constant 0.000000e+00 : f32
    %13 = vector.broadcast %cst_11 : f32 to vector<256x128xf32>
    %14 = arith.maximumf %12, %13 : vector<256x128xf32>
    %c0_12 = arith.constant 0 : index
    %c0_13 = arith.constant 0 : index
    %15 = vector.load %arg6[%c0_12, %c0_13] : memref<128x128xf32, #tpu.memory_space<vmem>>, vector<128x128xf32>
    %cst_14 = arith.constant dense<0.000000e+00> : vector<256x128xf32>
    %16 = tpu.matmul %14, %15, %cst_14 {dimension_numbers = #tpu.dot_dimension_numbers<[1], [0], [0], [1], [0, 0, 1, 1], [], []>} : vector<256x128xf32>, vector<128x128xf32>, vector<256x128xf32> -> vector<256x128xf32>
    %c0_15 = arith.constant 0 : index
    %c0_16 = arith.constant 0 : index
    %17 = vector.load %arg7[%c0_15, %c0_16] : memref<1x128xf32, #tpu.memory_space<vmem>>, vector<1x128xf32>
    %18 = vector.broadcast %17 : vector<1x128xf32> to vector<256x128xf32>
    %19 = arith.addf %16, %18 : vector<256x128xf32>
    %20 = math.tanh %19 : vector<256x128xf32>
    %c0_17 = arith.constant 0 : index
    %c0_18 = arith.constant 0 : index
    %21 = vector.load %arg8[%c0_17, %c0_18] : memref<256x128xf32, #tpu.memory_space<vmem>>, vector<256x128xf32>
    tpu.vector_store %arg8[%c0_17, %c0_18], %20 {strides = array<i32>} : memref<256x128xf32, #tpu.memory_space<vmem>>, vector<256x128xf32>,
    return
  }
  func.func @transform_0(%arg0: i32) -> (i32, i32) {
    %c0_i32 = arith.constant 0 : i32
    %c0_i32_0 = arith.constant 0 : i32
    return %arg0, %c0_i32 : i32, i32
  }
  func.func @transform_1(%arg0: i32) -> (i32, i32) {
    %c0_i32 = arith.constant 0 : i32
    %c0_i32_0 = arith.constant 0 : i32
    %c0_i32_1 = arith.constant 0 : i32
    return %c0_i32, %c0_i32_0 : i32, i32
  }
  func.func @transform_2(%arg0: i32) -> (i32, i32) {
    %c0_i32 = arith.constant 0 : i32
    %c0_i32_0 = arith.constant 0 : i32
    %c0_i32_1 = arith.constant 0 : i32
    return %c0_i32, %c0_i32_0 : i32, i32
  }
  func.func @transform_3(%arg0: i32) -> (i32, i32) {
    %c0_i32 = arith.constant 0 : i32
    %c0_i32_0 = arith.constant 0 : i32
    %c0_i32_1 = arith.constant 0 : i32
    return %c0_i32, %c0_i32_0 : i32, i32
  }
  func.func @transform_4(%arg0: i32) -> (i32, i32) {
    %c0_i32 = arith.constant 0 : i32
    %c0_i32_0 = arith.constant 0 : i32
    %c0_i32_1 = arith.constant 0 : i32
    return %c0_i32, %c0_i32_0 : i32, i32
  }
  func.func @transform_5(%arg0: i32) -> (i32, i32) {
    %c0_i32 = arith.constant 0 : i32
    %c0_i32_0 = arith.constant 0 : i32
    %c0_i32_1 = arith.constant 0 : i32
    return %c0_i32, %c0_i32_0 : i32, i32
  }
  func.func @transform_6(%arg0: i32) -> (i32, i32) {
    %c0_i32 = arith.constant 0 : i32
    %c0_i32_0 = arith.constant 0 : i32
    %c0_i32_1 = arith.constant 0 : i32
    return %c0_i32, %c0_i32_0 : i32, i32
  }
  func.func @transform_7(%arg0: i32) -> (i32, i32) {
    %c0_i32 = arith.constant 0 : i32
    %c0_i32_0 = arith.constant 0 : i32
    return %arg0, %c0_i32 : i32, i32
  }
}

</mosaic_0001>

<llo_original>
// kernel: actor_forward.1
$region0: #{actor_forward.1}
  #allocation0 [shape = 'u32[]', space=smem, size = 0x4, offset = 0x4, fixed_abs, tag = 'smem constant byte address 0x4 - core index']
  #allocation1 [shape = 'u32[144,128]{1,0:T(1,128)}', space=vmem, size = 0x12000, scoped, tag = 'internal scratch']
  %s0 = inlined_call_operand.vmem [shape: f32[256,128], index: 0, kind: input, shape index: {}]
  %s1 = inlined_call_operand.vmem [shape: f32[128,128], index: 1, kind: input, shape index: {}]
  %s2 = inlined_call_operand.vmem [shape: f32[1,128], index: 2, kind: input, shape index: {}]
  %s3 = inlined_call_operand.vmem [shape: f32[128,128], index: 3, kind: input, shape index: {}]
  %s4 = inlined_call_operand.vmem [shape: f32[1,128], index: 4, kind: input, shape index: {}]
  %s5 = inlined_call_operand.vmem [shape: f32[128,128], index: 5, kind: input, shape index: {}]
  %s6 = inlined_call_operand.vmem [shape: f32[1,128], index: 6, kind: input, shape index: {}]
  %s7 = inlined_call_operand.vmem [shape: f32[256,128], index: 7, kind: output, shape index: {}]
  %s8 = sld [smem:[#allocation0]]
  $region38: #{actor_forward.1} parent=0
    _
  %s10 = ssub.s32 1, %s8
  %s11 = scalar_select 0, %s10, %s8
  // Predicated region
  $region2: #{actor_forward.1} parent=0 // pred_check
    _
  $region3: #{actor_forward.1} parent=0 // pred_check_branch
    %13 = sbr.rel (0) target = $region5
  $region4: #{actor_forward.1} parent=0 // pred_region
    _
  $region5: #{actor_forward.1} parent=0 // pred_fallthru
    _
  // Predicated region
  $region6: #{actor_forward.1} parent=0 // pred_check
    _
  $region7: #{actor_forward.1} parent=0 // pred_check_branch
    %15 = sbr.rel (0) target = $region9
  $region8: #{actor_forward.1} parent=0 // pred_region
    _
  $region9: #{actor_forward.1} parent=0 // pred_fallthru
    _
  // Predicated region
  $region10: #{actor_forward.1} parent=0 // pred_check
    _
  $region11: #{actor_forward.1} parent=0 // pred_check_branch
    %17 = sbr.rel (0) target = $region13
  $region12: #{actor_forward.1} parent=0 // pred_region
    _
  $region13: #{actor_forward.1} parent=0 // pred_fallthru
    _
  // Predicated region
  $region14: #{actor_forward.1} parent=0 // pred_check
    _
  $region15: #{actor_forward.1} parent=0 // pred_check_branch
    %19 = sbr.rel (0) target = $region17
  $region16: #{actor_forward.1} parent=0 // pred_region
    _
  $region17: #{actor_forward.1} parent=0 // pred_fallthru
    _
  // Predicated region
  $region18: #{actor_forward.1} parent=0 // pred_check
    _
  $region19: #{actor_forward.1} parent=0 // pred_check_branch
    %21 = sbr.rel (0) target = $region21
  $region20: #{actor_forward.1} parent=0 // pred_region
    _
  $region21: #{actor_forward.1} parent=0 // pred_fallthru
    _
  // Predicated region
  $region22: #{actor_forward.1} parent=0 // pred_check
    _
  $region23: #{actor_forward.1} parent=0 // pred_check_branch
    %23 = sbr.rel (0) target = $region25
  $region24: #{actor_forward.1} parent=0 // pred_region
    _
  $region25: #{actor_forward.1} parent=0 // pred_fallthru
    _
  // Predicated region
  $region26: #{actor_forward.1} parent=0 // pred_check
    _
  $region27: #{actor_forward.1} parent=0 // pred_check_branch
    %25 = sbr.rel (0) target = $region29
  $region28: #{actor_forward.1} parent=0 // pred_region
    _
  $region29: #{actor_forward.1} parent=0 // pred_fallthru
    _
  %v26 = vld [vmem:[%s0] sm:$0xff]
  %v27 = vld [vmem:[%s0 + $0x8] sm:$0xff]
  %v28 = vld [vmem:[%s0 + $0x10] sm:$0xff]
  %v29 = vld [vmem:[%s0 + $0x18] sm:$0xff]
  %v30 = vld [vmem:[%s0 + $0x20] sm:$0xff]
  %v31 = vld [vmem:[%s0 + $0x28] sm:$0xff]
  %v32 = vld [vmem:[%s0 + $0x30] sm:$0xff]
  %v33 = vld [vmem:[%s0 + $0x38] sm:$0xff]
  %v34 = vld [vmem:[%s0 + $0x40] sm:$0xff]
  %v35 = vld [vmem:[%s0 + $0x48] sm:$0xff]
  %v36 = vld [vmem:[%s0 + $0x50] sm:$0xff]
  %v37 = vld [vmem:[%s0 + $0x58] sm:$0xff]
  %v38 = vld [vmem:[%s0 + $0x60] sm:$0xff]
  %v39 = vld [vmem:[%s0 + $0x68] sm:$0xff]
  %v40 = vld [vmem:[%s0 + $0x70] sm:$0xff]
  %v41 = vld [vmem:[%s0 + $0x78] sm:$0xff]
  %v42 = vld [vmem:[%s0 + $0x80] sm:$0xff]
  %v43 = vld [vmem:[%s0 + $0x88] sm:$0xff]
  %v44 = vld [vmem:[%s0 + $0x90] sm:$0xff]
  %v45 = vld [vmem:[%s0 + $0x98] sm:$0xff]
  %v46 = vld [vmem:[%s0 + $0xa0] sm:$0xff]
  %v47 = vld [vmem:[%s0 + $0xa8] sm:$0xff]
  %v48 = vld [vmem:[%s0 + $0xb0] sm:$0xff]
  %v49 = vld [vmem:[%s0 + $0xb8] sm:$0xff]
  %v50 = vld [vmem:[%s0 + $0xc0] sm:$0xff]
  %v51 = vld [vmem:[%s0 + $0xc8] sm:$0xff]
  %v52 = vld [vmem:[%s0 + $0xd0] sm:$0xff]
  %v53 = vld [vmem:[%s0 + $0xd8] sm:$0xff]
  %v54 = vld [vmem:[%s0 + $0xe0] sm:$0xff]
  %v55 = vld [vmem:[%s0 + $0xe8] sm:$0xff]
  %v56 = vld [vmem:[%s0 + $0xf0] sm:$0xff]
  %v57 = vld [vmem:[%s0 + $0xf8] sm:$0xff]
  %v58 = vld [vmem:[%s1] sm:$0xff]
  %v59 = vld [vmem:[%s1 + $0x8] sm:$0xff]
  %v60 = vld [vmem:[%s1 + $0x10] sm:$0xff]
  %v61 = vld [vmem:[%s1 + $0x18] sm:$0xff]
  %v62 = vld [vmem:[%s1 + $0x20] sm:$0xff]
  %v63 = vld [vmem:[%s1 + $0x28] sm:$0xff]
  %v64 = vld [vmem:[%s1 + $0x30] sm:$0xff]
  %v65 = vld [vmem:[%s1 + $0x38] sm:$0xff]
  %v66 = vld [vmem:[%s1 + $0x40] sm:$0xff]
  %v67 = vld [vmem:[%s1 + $0x48] sm:$0xff]
  %v68 = vld [vmem:[%s1 + $0x50] sm:$0xff]
  %v69 = vld [vmem:[%s1 + $0x58] sm:$0xff]
  %v70 = vld [vmem:[%s1 + $0x60] sm:$0xff]
  %v71 = vld [vmem:[%s1 + $0x68] sm:$0xff]
  %v72 = vld [vmem:[%s1 + $0x70] sm:$0xff]
  %v73 = vld [vmem:[%s1 + $0x78] sm:$0xff]
  %v74 = vld [vmem:[%s2] sm:$0x1]
  %v76 = vlaneseq
  %v77 = vshrl.u32 %v76, 7
  %v78 = vsub.s32 0, %v77
  %v79 = vrot.slane %v74, %v78
  %81 = vmatprep.subr.mxu0 0.0
  %82 = vmatpush1.msra.mxu0 %v58
  %83 = vmatprep.subr.mxu0 0.0
  %84 = vmatpush1.msra.mxu0 %v59
  %85 = vmatprep.subr.mxu0 0.0
  %86 = vmatpush1.msra.mxu0 %v60
  %87 = vmatprep.subr.mxu0 0.0
  %88 = vmatpush1.msra.mxu0 %v61
  %89 = vmatprep.subr.mxu0 0.0
  %90 = vmatpush1.msra.mxu0 %v62
  %91 = vmatprep.subr.mxu0 0.0
  %92 = vmatpush1.msra.mxu0 %v63
  %93 = vmatprep.subr.mxu0 0.0
  %94 = vmatpush1.msra.mxu0 %v64
  %95 = vmatprep.subr.mxu0 0.0
  %96 = vmatpush1.msra.mxu0 %v65
  %97 = vmatprep.subr.mxu0 0.0
  %98 = vmatpush1.msra.mxu0 %v66
  %99 = vmatprep.subr.mxu0 0.0
  %100 = vmatpush1.msra.mxu0 %v67
  %101 = vmatprep.subr.mxu0 0.0
  %102 = vmatpush1.msra.mxu0 %v68
  %103 = vmatprep.subr.mxu0 0.0
  %104 = vmatpush1.msra.mxu0 %v69
  %105 = vmatprep.subr.mxu0 0.0
  %106 = vmatpush1.msra.mxu0 %v70
  %107 = vmatprep.subr.mxu0 0.0
  %108 = vmatpush1.msra.mxu0 %v71
  %109 = vmatprep.subr.mxu0 0.0
  %110 = vmatpush1.msra.mxu0 %v72
  %111 = vmatprep.subr.mxu0 0.0
  %112 = vmatpush1.msra.mxu0 %v73
  %113 = vmatprep.subr.mxu0 0.0
  %114 = vmatpush1.msra.mxu0 0.0
  %115 = vmatprep.subr.mxu0 0.0
  %116 = vmatpush1.msra.mxu0 0.0
  %117 = vmatprep.subr.mxu0 0.0
  %118 = vmatpush1.msra.mxu0 0.0
  %119 = vmatprep.subr.mxu0 0.0
  %120 = vmatpush1.msra.mxu0 0.0
  %121 = vmatprep.subr.mxu0 0.0
  %122 = vmatpush1.msra.mxu0 0.0
  %123 = vmatprep.subr.mxu0 0.0
  %124 = vmatpush1.msra.mxu0 0.0
  %125 = vmatprep.subr.mxu0 0.0
  %126 = vmatpush1.msra.mxu0 0.0
  %127 = vmatprep.subr.mxu0 0.0
  %128 = vmatpush1.msra.mxu0 0.0
  %129 = vmatprep.subr.mxu0 0.0
  %130 = vmatpush1.msra.mxu0 0.0
  %131 = vmatprep.subr.mxu0 0.0
  %132 = vmatpush1.msra.mxu0 0.0
  %133 = vmatprep.subr.mxu0 0.0
  %134 = vmatpush1.msra.mxu0 0.0
  %135 = vmatprep.subr.mxu0 0.0
  %136 = vmatpush1.msra.mxu0 0.0
  %137 = vmatprep.subr.mxu0 0.0
  %138 = vmatpush1.msra.mxu0 0.0
  %139 = vmatprep.subr.mxu0 0.0
  %140 = vmatpush1.msra.mxu0 0.0
  %141 = vmatprep.subr.mxu0 0.0
  %142 = vmatpush1.msra.mxu0 0.0
  %143 = vmatprep.subr.mxu0 0.0
  %144 = vmatpush1.msra.mxu0 0.0
  %145 = vmatprep.mubr.f32.mxu0 0.0
  %146 = vmatmul.mubr.f32.gmra.mrb[0].mxu0 %v26
  %v147 = vpop.f32.mrb[0].mxu0
  %v148 = vadd.f32 %v79, %v147
  %v149 = vpop.f32.mrb[0].mxu0
  %150 = vmatprep.mubr.f32.mxu0 0.0
  %151 = vmatmul.mubr.f32.gmra.mrb[0].mxu0 %v27
  %v152 = vpop.f32.mrb[0].mxu0
  %v153 = vadd.f32 %v79, %v152
  %v154 = vpop.f32.mrb[0].mxu0
  %155 = vmatprep.mubr.f32.mxu0 0.0
  %156 = vmatmul.mubr.f32.gmra.mrb[0].mxu0 %v28
  %v157 = vpop.f32.mrb[0].mxu0
  %v158 = vadd.f32 %v79, %v157
  %v159 = vpop.f32.mrb[0].mxu0
  %160 = vmatprep.mubr.f32.mxu0 0.0
  %161 = vmatmul.mubr.f32.gmra.mrb[0].mxu0 %v29
  %v162 = vpop.f32.mrb[0].mxu0
  %v163 = vadd.f32 %v79, %v162
  %v164 = vpop.f32.mrb[0].mxu0
  %165 = vmatprep.mubr.f32.mxu0 0.0
  %166 = vmatmul.mubr.f32.gmra.mrb[0].mxu0 %v30
  %v167 = vpop.f32.mrb[0].mxu0
  %v168 = vadd.f32 %v79, %v167
  %v169 = vpop.f32.mrb[0].mxu0
  %170 = vmatprep.mubr.f32.mxu0 0.0
  %171 = vmatmul.mubr.f32.gmra.mrb[0].mxu0 %v31
  %v172 = vpop.f32.mrb[0].mxu0
  %v173 = vadd.f32 %v79, %v172
  %v174 = vpop.f32.mrb[0].mxu0
  %175 = vmatprep.mubr.f32.mxu0 0.0
  %176 = vmatmul.mubr.f32.gmra.mrb[0].mxu0 %v32
  %v177 = vpop.f32.mrb[0].mxu0
  %v178 = vadd.f32 %v79, %v177
  %v179 = vpop.f32.mrb[0].mxu0
  %180 = vmatprep.mubr.f32.mxu0 0.0
  %181 = vmatmul.mubr.f32.gmra.mrb[0].mxu0 %v33
  %v182 = vpop.f32.mrb[0].mxu0
  %v183 = vadd.f32 %v79, %v182
  %v184 = vpop.f32.mrb[0].mxu0
  %185 = vmatprep.mubr.f32.mxu0 0.0
  %186 = vmatmul.mubr.f32.gmra.mrb[0].mxu0 %v34
  %v187 = vpop.f32.mrb[0].mxu0
  %v188 = vadd.f32 %v79, %v187
  %v189 = vpop.f32.mrb[0].mxu0
  %190 = vmatprep.mubr.f32.mxu0 0.0
  %191 = vmatmul.mubr.f32.gmra.mrb[0].mxu0 %v35
  %v192 = vpop.f32.mrb[0].mxu0
  %v193 = vadd.f32 %v79, %v192
  %v194 = vpop.f32.mrb[0].mxu0
  %195 = vmatprep.mubr.f32.mxu0 0.0
  %196 = vmatmul.mubr.f32.gmra.mrb[0].mxu0 %v36
  %v197 = vpop.f32.mrb[0].mxu0
  %v198 = vadd.f32 %v79, %v197
  %v199 = vpop.f32.mrb[0].mxu0
  %200 = vmatprep.mubr.f32.mxu0 0.0
  %201 = vmatmul.mubr.f32.gmra.mrb[0].mxu0 %v37
  %v202 = vpop.f32.mrb[0].mxu0
  %v203 = vadd.f32 %v79, %v202
  %v204 = vpop.f32.mrb[0].mxu0
  %205 = vmatprep.mubr.f32.mxu0 0.0
  %206 = vmatmul.mubr.f32.gmra.mrb[0].mxu0 %v38
  %v207 = vpop.f32.mrb[0].mxu0
  %v208 = vadd.f32 %v79, %v207
  %v209 = vpop.f32.mrb[0].mxu0
  %210 = vmatprep.mubr.f32.mxu0 0.0
  %211 = vmatmul.mubr.f32.gmra.mrb[0].mxu0 %v39
  %v212 = vpop.f32.mrb[0].mxu0
  %v213 = vadd.f32 %v79, %v212
  %v214 = vpop.f32.mrb[0].mxu0
  %215 = vmatprep.mubr.f32.mxu0 0.0
  %216 = vmatmul.mubr.f32.gmra.mrb[0].mxu0 %v40
  %v217 = vpop.f32.mrb[0].mxu0
  %v218 = vadd.f32 %v79, %v217
  %v219 = vpop.f32.mrb[0].mxu0
  %220 = vmatprep.mubr.f32.mxu0 0.0
  %221 = vmatmul.mubr.f32.gmra.mrb[0].mxu0 %v41
  %v222 = vpop.f32.mrb[0].mxu0
  %v223 = vadd.f32 %v79, %v222
  %v224 = vpop.f32.mrb[0].mxu0
  %225 = vmatprep.mubr.f32.mxu0 0.0
  %226 = vmatmul.mubr.f32.gmra.mrb[0].mxu0 %v42
  %v227 = vpop.f32.mrb[0].mxu0
  %v228 = vadd.f32 %v79, %v227
  %v229 = vpop.f32.mrb[0].mxu0
  %230 = vmatprep.mubr.f32.mxu0 0.0
  %231 = vmatmul.mubr.f32.gmra.mrb[0].mxu0 %v43
  %v232 = vpop.f32.mrb[0].mxu0
  %v233 = vadd.f32 %v79, %v232
  %v234 = vpop.f32.mrb[0].mxu0
  %235 = vmatprep.mubr.f32.mxu0 0.0
  %236 = vmatmul.mubr.f32.gmra.mrb[0].mxu0 %v44
  %v237 = vpop.f32.mrb[0].mxu0
  %v238 = vadd.f32 %v79, %v237
  %v239 = vpop.f32.mrb[0].mxu0
  %240 = vmatprep.mubr.f32.mxu0 0.0
  %241 = vmatmul.mubr.f32.gmra.mrb[0].mxu0 %v45
  %v242 = vpop.f32.mrb[0].mxu0
  %v243 = vadd.f32 %v79, %v242
  %v244 = vpop.f32.mrb[0].mxu0
  %245 = vmatprep.mubr.f32.mxu0 0.0
  %246 = vmatmul.mubr.f32.gmra.mrb[0].mxu0 %v46
  %v247 = vpop.f32.mrb[0].mxu0
  %v248 = vadd.f32 %v79, %v247
  %v249 = vpop.f32.mrb[0].mxu0
  %250 = vmatprep.mubr.f32.mxu0 0.0
  %251 = vmatmul.mubr.f32.gmra.mrb[0].mxu0 %v47
  %v252 = vpop.f32.mrb[0].mxu0
  %v253 = vadd.f32 %v79, %v252
  %v254 = vpop.f32.mrb[0].mxu0
  %255 = vmatprep.mubr.f32.mxu0 0.0
  %256 = vmatmul.mubr.f32.gmra.mrb[0].mxu0 %v48
  %v257 = vpop.f32.mrb[0].mxu0
  %v258 = vadd.f32 %v79, %v257
  %v259 = vpop.f32.mrb[0].mxu0
  %260 = vmatprep.mubr.f32.mxu0 0.0
  %261 = vmatmul.mubr.f32.gmra.mrb[0].mxu0 %v49
  %v262 = vpop.f32.mrb[0].mxu0
  %v263 = vadd.f32 %v79, %v262
  %v264 = vpop.f32.mrb[0].mxu0
  %265 = vmatprep.mubr.f32.mxu0 0.0
  %266 = vmatmul.mubr.f32.gmra.mrb[0].mxu0 %v50
  %v267 = vpop.f32.mrb[0].mxu0
  %v268 = vadd.f32 %v79, %v267
  %v269 = vpop.f32.mrb[0].mxu0
  %270 = vmatprep.mubr.f32.mxu0 0.0
  %271 = vmatmul.mubr.f32.gmra.mrb[0].mxu0 %v51
  %v272 = vpop.f32.mrb[0].mxu0
  %v273 = vadd.f32 %v79, %v272
  %v274 = vpop.f32.mrb[0].mxu0
  %275 = vmatprep.mubr.f32.mxu0 0.0
  %276 = vmatmul.mubr.f32.gmra.mrb[0].mxu0 %v52
  %v277 = vpop.f32.mrb[0].mxu0
  %v278 = vadd.f32 %v79, %v277
  %v279 = vpop.f32.mrb[0].mxu0
  %280 = vmatprep.mubr.f32.mxu0 0.0
  %281 = vmatmul.mubr.f32.gmra.mrb[0].mxu0 %v53
  %v282 = vpop.f32.mrb[0].mxu0
  %v283 = vadd.f32 %v79, %v282
  %v284 = vpop.f32.mrb[0].mxu0
  %285 = vmatprep.mubr.f32.mxu0 0.0
  %286 = vmatmul.mubr.f32.gmra.mrb[0].mxu0 %v54
  %v287 = vpop.f32.mrb[0].mxu0
  %v288 = vadd.f32 %v79, %v287
  %v289 = vpop.f32.mrb[0].mxu0
  %290 = vmatprep.mubr.f32.mxu0 0.0
  %291 = vmatmul.mubr.f32.gmra.mrb[0].mxu0 %v55
  %v292 = vpop.f32.mrb[0].mxu0
  %v293 = vadd.f32 %v79, %v292
  %v294 = vpop.f32.mrb[0].mxu0
  %295 = vmatprep.mubr.f32.mxu0 0.0
  %296 = vmatmul.mubr.f32.gmra.mrb[0].mxu0 %v56
  %v297 = vpop.f32.mrb[0].mxu0
  %v298 = vadd.f32 %v79, %v297
  %v299 = vpop.f32.mrb[0].mxu0
  %300 = vmatprep.mubr.f32.mxu0 0.0
  %301 = vmatmul.mubr.f32.gmra.mrb[0].mxu0 %v57
  %v302 = vpop.f32.mrb[0].mxu0
  %v303 = vadd.f32 %v79, %v302
  %v304 = vpop.f32.mrb[0].mxu0
  %305 = vdwg.mxu0
  %v306 = vmax.f32 %v148, 0.0
  %v307 = vmax.f32 %v153, 0.0
  %v308 = vmax.f32 %v158, 0.0
  %v309 = vmax.f32 %v163, 0.0
  %v310 = vmax.f32 %v168, 0.0
  %v311 = vmax.f32 %v173, 0.0
  %v312 = vmax.f32 %v178, 0.0
  %v313 = vmax.f32 %v183, 0.0
  %v314 = vmax.f32 %v188, 0.0
  %v315 = vmax.f32 %v193, 0.0
  %v316 = vmax.f32 %v198, 0.0
  %v317 = vmax.f32 %v203, 0.0
  %v318 = vmax.f32 %v208, 0.0
  %v319 = vmax.f32 %v213, 0.0
  %v320 = vmax.f32 %v218, 0.0
  %v321 = vmax.f32 %v223, 0.0
  %v322 = vmax.f32 %v228, 0.0
  %v323 = vmax.f32 %v233, 0.0
  %v324 = vmax.f32 %v238, 0.0
  %v325 = vmax.f32 %v243, 0.0
  %v326 = vmax.f32 %v248, 0.0
  %v327 = vmax.f32 %v253, 0.0
  %v328 = vmax.f32 %v258, 0.0
  %v329 = vmax.f32 %v263, 0.0
  %v330 = vmax.f32 %v268, 0.0
  %v331 = vmax.f32 %v273, 0.0
  %v332 = vmax.f32 %v278, 0.0
  %v333 = vmax.f32 %v283, 0.0
  %v334 = vmax.f32 %v288, 0.0
  %v335 = vmax.f32 %v293, 0.0
  %v336 = vmax.f32 %v298, 0.0
  %v337 = vmax.f32 %v303, 0.0
  %v338 = vld [vmem:[%s3] sm:$0xff]
  %v339 = vld [vmem:[%s3 + $0x8] sm:$0xff]
  %v340 = vld [vmem:[%s3 + $0x10] sm:$0xff]
  %v341 = vld [vmem:[%s3 + $0x18] sm:$0xff]
  %v342 = vld [vmem:[%s3 + $0x20] sm:$0xff]
  %v343 = vld [vmem:[%s3 + $0x28] sm:$0xff]
  %v344 = vld [vmem:[%s3 + $0x30] sm:$0xff]
  %v345 = vld [vmem:[%s3 + $0x38] sm:$0xff]
  %v346 = vld [vmem:[%s3 + $0x40] sm:$0xff]
  %v347 = vld [vmem:[%s3 + $0x48] sm:$0xff]
  %v348 = vld [vmem:[%s3 + $0x50] sm:$0xff]
  %v349 = vld [vmem:[%s3 + $0x58] sm:$0xff]
  %v350 = vld [vmem:[%s3 + $0x60] sm:$0xff]
  %v351 = vld [vmem:[%s3 + $0x68] sm:$0xff]
  %v352 = vld [vmem:[%s3 + $0x70] sm:$0xff]
  %v353 = vld [vmem:[%s3 + $0x78] sm:$0xff]
  %v354 = vld [vmem:[%s4] sm:$0x1]
  %v356 = vlaneseq
  %v357 = vshrl.u32 %v356, 7
  %v358 = vsub.s32 0, %v357
  %v359 = vrot.slane %v354, %v358
  %361 = vmatprep.subr.mxu0 0.0
  %362 = vmatpush1.msra.mxu0 %v338
  %363 = vmatprep.subr.mxu0 0.0
  %364 = vmatpush1.msra.mxu0 %v339
  %365 = vmatprep.subr.mxu0 0.0
  %366 = vmatpush1.msra.mxu0 %v340
  %367 = vmatprep.subr.mxu0 0.0
  %368 = vmatpush1.msra.mxu0 %v341
  %369 = vmatprep.subr.mxu0 0.0
  %370 = vmatpush1.msra.mxu0 %v342
  %371 = vmatprep.subr.mxu0 0.0
  %372 = vmatpush1.msra.mxu0 %v343
  %373 = vmatprep.subr.mxu0 0.0
  %374 = vmatpush1.msra.mxu0 %v344
  %375 = vmatprep.subr.mxu0 0.0
  %376 = vmatpush1.msra.mxu0 %v345
  %377 = vmatprep.subr.mxu0 0.0
  %378 = vmatpush1.msra.mxu0 %v346
  %379 = vmatprep.subr.mxu0 0.0
  %380 = vmatpush1.msra.mxu0 %v347
  %381 = vmatprep.subr.mxu0 0.0
  %382 = vmatpush1.msra.mxu0 %v348
  %383 = vmatprep.subr.mxu0 0.0
  %384 = vmatpush1.msra.mxu0 %v349
  %385 = vmatprep.subr.mxu0 0.0
  %386 = vmatpush1.msra.mxu0 %v350
  %387 = vmatprep.subr.mxu0 0.0
  %388 = vmatpush1.msra.mxu0 %v351
  %389 = vmatprep.subr.mxu0 0.0
  %390 = vmatpush1.msra.mxu0 %v352
  %391 = vmatprep.subr.mxu0 0.0
  %392 = vmatpush1.msra.mxu0 %v353
  %393 = vmatprep.subr.mxu0 0.0
  %394 = vmatpush1.msra.mxu0 0.0
  %395 = vmatprep.subr.mxu0 0.0
  %396 = vmatpush1.msra.mxu0 0.0
  %397 = vmatprep.subr.mxu0 0.0
  %398 = vmatpush1.msra.mxu0 0.0
  %399 = vmatprep.subr.mxu0 0.0
  %400 = vmatpush1.msra.mxu0 0.0
  %401 = vmatprep.subr.mxu0 0.0
  %402 = vmatpush1.msra.mxu0 0.0
  %403 = vmatprep.subr.mxu0 0.0
  %404 = vmatpush1.msra.mxu0 0.0
  %405 = vmatprep.subr.mxu0 0.0
  %406 = vmatpush1.msra.mxu0 0.0
  %407 = vmatprep.subr.mxu0 0.0
  %408 = vmatpush1.msra.mxu0 0.0
  %409 = vmatprep.subr.mxu0 0.0
  %410 = vmatpush1.msra.mxu0 0.0
  %411 = vmatprep.subr.mxu0 0.0
  %412 = vmatpush1.msra.mxu0 0.0
  %413 = vmatprep.subr.mxu0 0.0
  %414 = vmatpush1.msra.mxu0 0.0
  %415 = vmatprep.subr.mxu0 0.0
  %416 = vmatpush1.msra.mxu0 0.0
  %417 = vmatprep.subr.mxu0 0.0
  %418 = vmatpush1.msra.mxu0 0.0
  %419 = vmatprep.subr.mxu0 0.0
  %420 = vmatpush1.msra.mxu0 0.0
  %421 = vmatprep.subr.mxu0 0.0
  %422 = vmatpush1.msra.mxu0 0.0
  %423 = vmatprep.subr.mxu0 0.0
  %424 = vmatpush1.msra.mxu0 0.0
  %425 = vmatprep.mubr.f32.mxu0 0.0
  %426 = vmatmul.mubr.f32.gmra.mrb[0].mxu0 %v306
  %v427 = vpop.f32.mrb[0].mxu0
  %v428 = vadd.f32 %v359, %v427
  %v429 = vpop.f32.mrb[0].mxu0
  %430 = vmatprep.mubr.f32.mxu0 0.0
  %431 = vmatmul.mubr.f32.gmra.mrb[0].mxu0 %v307
  %v432 = vpop.f32.mrb[0].mxu0
  %v433 = vadd.f32 %v359, %v432
  %v434 = vpop.f32.mrb[0].mxu0
  %435 = vmatprep.mubr.f32.mxu0 0.0
  %436 = vmatmul.mubr.f32.gmra.mrb[0].mxu0 %v308
  %v437 = vpop.f32.mrb[0].mxu0
  %v438 = vadd.f32 %v359, %v437
  %v439 = vpop.f32.mrb[0].mxu0
  %440 = vmatprep.mubr.f32.mxu0 0.0
  %441 = vmatmul.mubr.f32.gmra.mrb[0].mxu0 %v309
  %v442 = vpop.f32.mrb[0].mxu0
  %v443 = vadd.f32 %v359, %v442
  %v444 = vpop.f32.mrb[0].mxu0
  %445 = vmatprep.mubr.f32.mxu0 0.0
  %446 = vmatmul.mubr.f32.gmra.mrb[0].mxu0 %v310
  %v447 = vpop.f32.mrb[0].mxu0
  %v448 = vadd.f32 %v359, %v447
  %v449 = vpop.f32.mrb[0].mxu0
  %450 = vmatprep.mubr.f32.mxu0 0.0
  %451 = vmatmul.mubr.f32.gmra.mrb[0].mxu0 %v311
  %v452 = vpop.f32.mrb[0].mxu0
  %v453 = vadd.f32 %v359, %v452
  %v454 = vpop.f32.mrb[0].mxu0
  %455 = vmatprep.mubr.f32.mxu0 0.0
  %456 = vmatmul.mubr.f32.gmra.mrb[0].mxu0 %v312
  %v457 = vpop.f32.mrb[0].mxu0
  %v458 = vadd.f32 %v359, %v457
  %v459 = vpop.f32.mrb[0].mxu0
  %460 = vmatprep.mubr.f32.mxu0 0.0
  %461 = vmatmul.mubr.f32.gmra.mrb[0].mxu0 %v313
  %v462 = vpop.f32.mrb[0].mxu0
  %v463 = vadd.f32 %v359, %v462
  %v464 = vpop.f32.mrb[0].mxu0
  %465 = vmatprep.mubr.f32.mxu0 0.0
  %466 = vmatmul.mubr.f32.gmra.mrb[0].mxu0 %v314
  %v467 = vpop.f32.mrb[0].mxu0
  %v468 = vadd.f32 %v359, %v467
  %v469 = vpop.f32.mrb[0].mxu0
  %470 = vmatprep.mubr.f32.mxu0 0.0
  %471 = vmatmul.mubr.f32.gmra.mrb[0].mxu0 %v315
  %v472 = vpop.f32.mrb[0].mxu0
  %v473 = vadd.f32 %v359, %v472
  %v474 = vpop.f32.mrb[0].mxu0
  %475 = vmatprep.mubr.f32.mxu0 0.0
  %476 = vmatmul.mubr.f32.gmra.mrb[0].mxu0 %v316
  %v477 = vpop.f32.mrb[0].mxu0
  %v478 = vadd.f32 %v359, %v477
  %v479 = vpop.f32.mrb[0].mxu0
  %480 = vmatprep.mubr.f32.mxu0 0.0
  %481 = vmatmul.mubr.f32.gmra.mrb[0].mxu0 %v317
  %v482 = vpop.f32.mrb[0].mxu0
  %v483 = vadd.f32 %v359, %v482
  %v484 = vpop.f32.mrb[0].mxu0
  %485 = vmatprep.mubr.f32.mxu0 0.0
  %486 = vmatmul.mubr.f32.gmra.mrb[0].mxu0 %v318
  %v487 = vpop.f32.mrb[0].mxu0
  %v488 = vadd.f32 %v359, %v487
  %v489 = vpop.f32.mrb[0].mxu0
  %490 = vmatprep.mubr.f32.mxu0 0.0
  %491 = vmatmul.mubr.f32.gmra.mrb[0].mxu0 %v319
  %v492 = vpop.f32.mrb[0].mxu0
  %v493 = vadd.f32 %v359, %v492
  %v494 = vpop.f32.mrb[0].mxu0
  %495 = vmatprep.mubr.f32.mxu0 0.0
  %496 = vmatmul.mubr.f32.gmra.mrb[0].mxu0 %v320
  %v497 = vpop.f32.mrb[0].mxu0
  %v498 = vadd.f32 %v359, %v497
  %v499 = vpop.f32.mrb[0].mxu0
  %500 = vmatprep.mubr.f32.mxu0 0.0
  %501 = vmatmul.mubr.f32.gmra.mrb[0].mxu0 %v321
  %v502 = vpop.f32.mrb[0].mxu0
  %v503 = vadd.f32 %v359, %v502
  %v504 = vpop.f32.mrb[0].mxu0
  %505 = vmatprep.mubr.f32.mxu0 0.0
  %506 = vmatmul.mubr.f32.gmra.mrb[0].mxu0 %v322
  %v507 = vpop.f32.mrb[0].mxu0
  %v508 = vadd.f32 %v359, %v507
  %v509 = vpop.f32.mrb[0].mxu0
  %510 = vmatprep.mubr.f32.mxu0 0.0
  %511 = vmatmul.mubr.f32.gmra.mrb[0].mxu0 %v323
  %v512 = vpop.f32.mrb[0].mxu0
  %v513 = vadd.f32 %v359, %v512
  %v514 = vpop.f32.mrb[0].mxu0
  %515 = vmatprep.mubr.f32.mxu0 0.0
  %516 = vmatmul.mubr.f32.gmra.mrb[0].mxu0 %v324
  %v517 = vpop.f32.mrb[0].mxu0
  %v518 = vadd.f32 %v359, %v517
  %v519 = vpop.f32.mrb[0].mxu0
  %520 = vmatprep.mubr.f32.mxu0 0.0
  %521 = vmatmul.mubr.f32.gmra.mrb[0].mxu0 %v325
  %v522 = vpop.f32.mrb[0].mxu0
  %v523 = vadd.f32 %v359, %v522
  %v524 = vpop.f32.mrb[0].mxu0
  %525 = vmatprep.mubr.f32.mxu0 0.0
  %526 = vmatmul.mubr.f32.gmra.mrb[0].mxu0 %v326
  %v527 = vpop.f32.mrb[0].mxu0
  %v528 = vadd.f32 %v359, %v527
  %v529 = vpop.f32.mrb[0].mxu0
  %530 = vmatprep.mubr.f32.mxu0 0.0
  %531 = vmatmul.mubr.f32.gmra.mrb[0].mxu0 %v327
  %v532 = vpop.f32.mrb[0].mxu0
  %v533 = vadd.f32 %v359, %v532
  %v534 = vpop.f32.mrb[0].mxu0
  %535 = vmatprep.mubr.f32.mxu0 0.0
  %536 = vmatmul.mubr.f32.gmra.mrb[0].mxu0 %v328
  %v537 = vpop.f32.mrb[0].mxu0
  %v538 = vadd.f32 %v359, %v537
  %v539 = vpop.f32.mrb[0].mxu0
  %540 = vmatprep.mubr.f32.mxu0 0.0
  %541 = vmatmul.mubr.f32.gmra.mrb[0].mxu0 %v329
  %v542 = vpop.f32.mrb[0].mxu0
  %v543 = vadd.f32 %v359, %v542
  %v544 = vpop.f32.mrb[0].mxu0
  %545 = vmatprep.mubr.f32.mxu0 0.0
  %546 = vmatmul.mubr.f32.gmra.mrb[0].mxu0 %v330
  %v547 = vpop.f32.mrb[0].mxu0
  %v548 = vadd.f32 %v359, %v547
  %v549 = vpop.f32.mrb[0].mxu0
  %550 = vmatprep.mubr.f32.mxu0 0.0
  %551 = vmatmul.mubr.f32.gmra.mrb[0].mxu0 %v331
  %v552 = vpop.f32.mrb[0].mxu0
  %v553 = vadd.f32 %v359, %v552
  %v554 = vpop.f32.mrb[0].mxu0
  %555 = vmatprep.mubr.f32.mxu0 0.0
  %556 = vmatmul.mubr.f32.gmra.mrb[0].mxu0 %v332
  %v557 = vpop.f32.mrb[0].mxu0
  %v558 = vadd.f32 %v359, %v557
  %v559 = vpop.f32.mrb[0].mxu0
  %560 = vmatprep.mubr.f32.mxu0 0.0
  %561 = vmatmul.mubr.f32.gmra.mrb[0].mxu0 %v333
  %v562 = vpop.f32.mrb[0].mxu0
  %v563 = vadd.f32 %v359, %v562
  %v564 = vpop.f32.mrb[0].mxu0
  %565 = vmatprep.mubr.f32.mxu0 0.0
  %566 = vmatmul.mubr.f32.gmra.mrb[0].mxu0 %v334
  %v567 = vpop.f32.mrb[0].mxu0
  %v568 = vadd.f32 %v359, %v567
  %v569 = vpop.f32.mrb[0].mxu0
  %570 = vmatprep.mubr.f32.mxu0 0.0
  %571 = vmatmul.mubr.f32.gmra.mrb[0].mxu0 %v335
  %v572 = vpop.f32.mrb[0].mxu0
  %v573 = vadd.f32 %v359, %v572
  %v574 = vpop.f32.mrb[0].mxu0
  %575 = vmatprep.mubr.f32.mxu0 0.0
  %576 = vmatmul.mubr.f32.gmra.mrb[0].mxu0 %v336
  %v577 = vpop.f32.mrb[0].mxu0
  %v578 = vadd.f32 %v359, %v577
  %v579 = vpop.f32.mrb[0].mxu0
  %580 = vmatprep.mubr.f32.mxu0 0.0
  %581 = vmatmul.mubr.f32.gmra.mrb[0].mxu0 %v337
  %v582 = vpop.f32.mrb[0].mxu0
  %v583 = vadd.f32 %v359, %v582
  %v584 = vpop.f32.mrb[0].mxu0
  %585 = vdwg.mxu0
  %v586 = vmax.f32 %v428, 0.0
  %v587 = vmax.f32 %v433, 0.0
  %v588 = vmax.f32 %v438, 0.0
  %v589 = vmax.f32 %v443, 0.0
  %v590 = vmax.f32 %v448, 0.0
  %v591 = vmax.f32 %v453, 0.0
  %v592 = vmax.f32 %v458, 0.0
  %v593 = vmax.f32 %v463, 0.0
  %v594 = vmax.f32 %v468, 0.0
  %v595 = vmax.f32 %v473, 0.0
  %v596 = vmax.f32 %v478, 0.0
  %v597 = vmax.f32 %v483, 0.0
  %v598 = vmax.f32 %v488, 0.0
  %v599 = vmax.f32 %v493, 0.0
  %v600 = vmax.f32 %v498, 0.0
  %v601 = vmax.f32 %v503, 0.0
  %v602 = vmax.f32 %v508, 0.0
  %v603 = vmax.f32 %v513, 0.0
  %v604 = vmax.f32 %v518, 0.0
  %v605 = vmax.f32 %v523, 0.0
  %v606 = vmax.f32 %v528, 0.0
  %v607 = vmax.f32 %v533, 0.0
  %v608 = vmax.f32 %v538, 0.0
  %v609 = vmax.f32 %v543, 0.0
  %v610 = vmax.f32 %v548, 0.0
  %v611 = vmax.f32 %v553, 0.0
  %v612 = vmax.f32 %v558, 0.0
  %v613 = vmax.f32 %v563, 0.0
  %v614 = vmax.f32 %v568, 0.0
  %v615 = vmax.f32 %v573, 0.0
  %v616 = vmax.f32 %v578, 0.0
  %v617 = vmax.f32 %v583, 0.0
  %v618 = vld [vmem:[%s5] sm:$0xff]
  %v619 = vld [vmem:[%s5 + $0x8] sm:$0xff]
  %v620 = vld [vmem:[%s5 + $0x10] sm:$0xff]
  %v621 = vld [vmem:[%s5 + $0x18] sm:$0xff]
  %v622 = vld [vmem:[%s5 + $0x20] sm:$0xff]
  %v623 = vld [vmem:[%s5 + $0x28] sm:$0xff]
  %v624 = vld [vmem:[%s5 + $0x30] sm:$0xff]
  %v625 = vld [vmem:[%s5 + $0x38] sm:$0xff]
  %v626 = vld [vmem:[%s5 + $0x40] sm:$0xff]
  %v627 = vld [vmem:[%s5 + $0x48] sm:$0xff]
  %v628 = vld [vmem:[%s5 + $0x50] sm:$0xff]
  %v629 = vld [vmem:[%s5 + $0x58] sm:$0xff]
  %v630 = vld [vmem:[%s5 + $0x60] sm:$0xff]
  %v631 = vld [vmem:[%s5 + $0x68] sm:$0xff]
  %v632 = vld [vmem:[%s5 + $0x70] sm:$0xff]
  %v633 = vld [vmem:[%s5 + $0x78] sm:$0xff]
  %v634 = vld [vmem:[%s6] sm:$0x1]
  %v636 = vlaneseq
  %v637 = vshrl.u32 %v636, 7
  %v638 = vsub.s32 0, %v637
  %v639 = vrot.slane %v634, %v638
  %641 = vmatprep.subr.mxu0 0.0
  %642 = vmatpush1.msra.mxu0 %v618
  %643 = vmatprep.subr.mxu0 0.0
  %644 = vmatpush1.msra.mxu0 %v619
  %645 = vmatprep.subr.mxu0 0.0
  %646 = vmatpush1.msra.mxu0 %v620
  %647 = vmatprep.subr.mxu0 0.0
  %648 = vmatpush1.msra.mxu0 %v621
  %649 = vmatprep.subr.mxu0 0.0
  %650 = vmatpush1.msra.mxu0 %v622
  %651 = vmatprep.subr.mxu0 0.0
  %652 = vmatpush1.msra.mxu0 %v623
  %653 = vmatprep.subr.mxu0 0.0
  %654 = vmatpush1.msra.mxu0 %v624
  %655 = vmatprep.subr.mxu0 0.0
  %656 = vmatpush1.msra.mxu0 %v625
  %657 = vmatprep.subr.mxu0 0.0
  %658 = vmatpush1.msra.mxu0 %v626
  %659 = vmatprep.subr.mxu0 0.0
  %660 = vmatpush1.msra.mxu0 %v627
  %661 = vmatprep.subr.mxu0 0.0
  %662 = vmatpush1.msra.mxu0 %v628
  %663 = vmatprep.subr.mxu0 0.0
  %664 = vmatpush1.msra.mxu0 %v629
  %665 = vmatprep.subr.mxu0 0.0
  %666 = vmatpush1.msra.mxu0 %v630
  %667 = vmatprep.subr.mxu0 0.0
  %668 = vmatpush1.msra.mxu0 %v631
  %669 = vmatprep.subr.mxu0 0.0
  %670 = vmatpush1.msra.mxu0 %v632
  %671 = vmatprep.subr.mxu0 0.0
  %672 = vmatpush1.msra.mxu0 %v633
  %673 = vmatprep.subr.mxu0 0.0
  %674 = vmatpush1.msra.mxu0 0.0
  %675 = vmatprep.subr.mxu0 0.0
  %676 = vmatpush1.msra.mxu0 0.0
  %677 = vmatprep.subr.mxu0 0.0
  %678 = vmatpush1.msra.mxu0 0.0
  %679 = vmatprep.subr.mxu0 0.0
  %680 = vmatpush1.msra.mxu0 0.0
  %681 = vmatprep.subr.mxu0 0.0
  %682 = vmatpush1.msra.mxu0 0.0
  %683 = vmatprep.subr.mxu0 0.0
  %684 = vmatpush1.msra.mxu0 0.0
  %685 = vmatprep.subr.mxu0 0.0
  %686 = vmatpush1.msra.mxu0 0.0
  %687 = vmatprep.subr.mxu0 0.0
  %688 = vmatpush1.msra.mxu0 0.0
  %689 = vmatprep.subr.mxu0 0.0
  %690 = vmatpush1.msra.mxu0 0.0
  %691 = vmatprep.subr.mxu0 0.0
  %692 = vmatpush1.msra.mxu0 0.0
  %693 = vmatprep.subr.mxu0 0.0
  %694 = vmatpush1.msra.mxu0 0.0
  %695 = vmatprep.subr.mxu0 0.0
  %696 = vmatpush1.msra.mxu0 0.0
  %697 = vmatprep.subr.mxu0 0.0
  %698 = vmatpush1.msra.mxu0 0.0
  %699 = vmatprep.subr.mxu0 0.0
  %700 = vmatpush1.msra.mxu0 0.0
  %701 = vmatprep.subr.mxu0 0.0
  %702 = vmatpush1.msra.mxu0 0.0
  %703 = vmatprep.subr.mxu0 0.0
  %704 = vmatpush1.msra.mxu0 0.0
  %705 = vmatprep.mubr.f32.mxu0 0.0
  %706 = vmatmul.mubr.f32.gmra.mrb[0].mxu0 %v586
  %v707 = vpop.f32.mrb[0].mxu0
  %v708 = vadd.f32 %v639, %v707
  %v709 = vpop.f32.mrb[0].mxu0
  %710 = vmatprep.mubr.f32.mxu0 0.0
  %711 = vmatmul.mubr.f32.gmra.mrb[0].mxu0 %v587
  %v712 = vpop.f32.mrb[0].mxu0
  %v713 = vadd.f32 %v639, %v712
  %v714 = vpop.f32.mrb[0].mxu0
  %715 = vmatprep.mubr.f32.mxu0 0.0
  %716 = vmatmul.mubr.f32.gmra.mrb[0].mxu0 %v588
  %v717 = vpop.f32.mrb[0].mxu0
  %v718 = vadd.f32 %v639, %v717
  %v719 = vpop.f32.mrb[0].mxu0
  %720 = vmatprep.mubr.f32.mxu0 0.0
  %721 = vmatmul.mubr.f32.gmra.mrb[0].mxu0 %v589
  %v722 = vpop.f32.mrb[0].mxu0
  %v723 = vadd.f32 %v639, %v722
  %v724 = vpop.f32.mrb[0].mxu0
  %725 = vmatprep.mubr.f32.mxu0 0.0
  %726 = vmatmul.mubr.f32.gmra.mrb[0].mxu0 %v590
  %v727 = vpop.f32.mrb[0].mxu0
  %v728 = vadd.f32 %v639, %v727
  %v729 = vpop.f32.mrb[0].mxu0
  %730 = vmatprep.mubr.f32.mxu0 0.0
  %731 = vmatmul.mubr.f32.gmra.mrb[0].mxu0 %v591
  %v732 = vpop.f32.mrb[0].mxu0
  %v733 = vadd.f32 %v639, %v732
  %v734 = vpop.f32.mrb[0].mxu0
  %735 = vmatprep.mubr.f32.mxu0 0.0
  %736 = vmatmul.mubr.f32.gmra.mrb[0].mxu0 %v592
  %v737 = vpop.f32.mrb[0].mxu0
  %v738 = vadd.f32 %v639, %v737
  %v739 = vpop.f32.mrb[0].mxu0
  %740 = vmatprep.mubr.f32.mxu0 0.0
  %741 = vmatmul.mubr.f32.gmra.mrb[0].mxu0 %v593
  %v742 = vpop.f32.mrb[0].mxu0
  %v743 = vadd.f32 %v639, %v742
  %v744 = vpop.f32.mrb[0].mxu0
  %745 = vmatprep.mubr.f32.mxu0 0.0
  %746 = vmatmul.mubr.f32.gmra.mrb[0].mxu0 %v594
  %v747 = vpop.f32.mrb[0].mxu0
  %v748 = vadd.f32 %v639, %v747
  %v749 = vpop.f32.mrb[0].mxu0
  %750 = vmatprep.mubr.f32.mxu0 0.0
  %751 = vmatmul.mubr.f32.gmra.mrb[0].mxu0 %v595
  %v752 = vpop.f32.mrb[0].mxu0
  %v753 = vadd.f32 %v639, %v752
  %v754 = vpop.f32.mrb[0].mxu0
  %755 = vmatprep.mubr.f32.mxu0 0.0
  %756 = vmatmul.mubr.f32.gmra.mrb[0].mxu0 %v596
  %v757 = vpop.f32.mrb[0].mxu0
  %v758 = vadd.f32 %v639, %v757
  %v759 = vpop.f32.mrb[0].mxu0
  %760 = vmatprep.mubr.f32.mxu0 0.0
  %761 = vmatmul.mubr.f32.gmra.mrb[0].mxu0 %v597
  %v762 = vpop.f32.mrb[0].mxu0
  %v763 = vadd.f32 %v639, %v762
  %v764 = vpop.f32.mrb[0].mxu0
  %765 = vmatprep.mubr.f32.mxu0 0.0
  %766 = vmatmul.mubr.f32.gmra.mrb[0].mxu0 %v598
  %v767 = vpop.f32.mrb[0].mxu0
  %v768 = vadd.f32 %v639, %v767
  %v769 = vpop.f32.mrb[0].mxu0
  %770 = vmatprep.mubr.f32.mxu0 0.0
  %771 = vmatmul.mubr.f32.gmra.mrb[0].mxu0 %v599
  %v772 = vpop.f32.mrb[0].mxu0
  %v773 = vadd.f32 %v639, %v772
  %v774 = vpop.f32.mrb[0].mxu0
  %775 = vmatprep.mubr.f32.mxu0 0.0
  %776 = vmatmul.mubr.f32.gmra.mrb[0].mxu0 %v600
  %v777 = vpop.f32.mrb[0].mxu0
  %v778 = vadd.f32 %v639, %v777
  %v779 = vpop.f32.mrb[0].mxu0
  %780 = vmatprep.mubr.f32.mxu0 0.0
  %781 = vmatmul.mubr.f32.gmra.mrb[0].mxu0 %v601
  %v782 = vpop.f32.mrb[0].mxu0
  %v783 = vadd.f32 %v639, %v782
  %v784 = vpop.f32.mrb[0].mxu0
  %785 = vmatprep.mubr.f32.mxu0 0.0
  %786 = vmatmul.mubr.f32.gmra.mrb[0].mxu0 %v602
  %v787 = vpop.f32.mrb[0].mxu0
  %v788 = vadd.f32 %v639, %v787
  %v789 = vpop.f32.mrb[0].mxu0
  %790 = vmatprep.mubr.f32.mxu0 0.0
  %791 = vmatmul.mubr.f32.gmra.mrb[0].mxu0 %v603
  %v792 = vpop.f32.mrb[0].mxu0
  %v793 = vadd.f32 %v639, %v792
  %v794 = vpop.f32.mrb[0].mxu0
  %795 = vmatprep.mubr.f32.mxu0 0.0
  %796 = vmatmul.mubr.f32.gmra.mrb[0].mxu0 %v604
  %v797 = vpop.f32.mrb[0].mxu0
  %v798 = vadd.f32 %v639, %v797
  %v799 = vpop.f32.mrb[0].mxu0
  %800 = vmatprep.mubr.f32.mxu0 0.0
  %801 = vmatmul.mubr.f32.gmra.mrb[0].mxu0 %v605
  %v802 = vpop.f32.mrb[0].mxu0
  %v803 = vadd.f32 %v639, %v802
  %v804 = vpop.f32.mrb[0].mxu0
  %805 = vmatprep.mubr.f32.mxu0 0.0
  %806 = vmatmul.mubr.f32.gmra.mrb[0].mxu0 %v606
  %v807 = vpop.f32.mrb[0].mxu0
  %v808 = vadd.f32 %v639, %v807
  %v809 = vpop.f32.mrb[0].mxu0
  %810 = vmatprep.mubr.f32.mxu0 0.0
  %811 = vmatmul.mubr.f32.gmra.mrb[0].mxu0 %v607
  %v812 = vpop.f32.mrb[0].mxu0
  %v813 = vadd.f32 %v639, %v812
  %v814 = vpop.f32.mrb[0].mxu0
  %815 = vmatprep.mubr.f32.mxu0 0.0
  %816 = vmatmul.mubr.f32.gmra.mrb[0].mxu0 %v608
  %v817 = vpop.f32.mrb[0].mxu0
  %v818 = vadd.f32 %v639, %v817
  %v819 = vpop.f32.mrb[0].mxu0
  %820 = vmatprep.mubr.f32.mxu0 0.0
  %821 = vmatmul.mubr.f32.gmra.mrb[0].mxu0 %v609
  %v822 = vpop.f32.mrb[0].mxu0
  %v823 = vadd.f32 %v639, %v822
  %v824 = vpop.f32.mrb[0].mxu0
  %825 = vmatprep.mubr.f32.mxu0 0.0
  %826 = vmatmul.mubr.f32.gmra.mrb[0].mxu0 %v610
  %v827 = vpop.f32.mrb[0].mxu0
  %v828 = vadd.f32 %v639, %v827
  %v829 = vpop.f32.mrb[0].mxu0
  %830 = vmatprep.mubr.f32.mxu0 0.0
  %831 = vmatmul.mubr.f32.gmra.mrb[0].mxu0 %v611
  %v832 = vpop.f32.mrb[0].mxu0
  %v833 = vadd.f32 %v639, %v832
  %v834 = vpop.f32.mrb[0].mxu0
  %835 = vmatprep.mubr.f32.mxu0 0.0
  %836 = vmatmul.mubr.f32.gmra.mrb[0].mxu0 %v612
  %v837 = vpop.f32.mrb[0].mxu0
  %v838 = vadd.f32 %v639, %v837
  %v839 = vpop.f32.mrb[0].mxu0
  %840 = vmatprep.mubr.f32.mxu0 0.0
  %841 = vmatmul.mubr.f32.gmra.mrb[0].mxu0 %v613
  %v842 = vpop.f32.mrb[0].mxu0
  %v843 = vadd.f32 %v639, %v842
  %v844 = vpop.f32.mrb[0].mxu0
  %845 = vmatprep.mubr.f32.mxu0 0.0
  %846 = vmatmul.mubr.f32.gmra.mrb[0].mxu0 %v614
  %v847 = vpop.f32.mrb[0].mxu0
  %v848 = vadd.f32 %v639, %v847
  %v849 = vpop.f32.mrb[0].mxu0
  %850 = vmatprep.mubr.f32.mxu0 0.0
  %851 = vmatmul.mubr.f32.gmra.mrb[0].mxu0 %v615
  %v852 = vpop.f32.mrb[0].mxu0
  %v853 = vadd.f32 %v639, %v852
  %v854 = vpop.f32.mrb[0].mxu0
  %855 = vmatprep.mubr.f32.mxu0 0.0
  %856 = vmatmul.mubr.f32.gmra.mrb[0].mxu0 %v616
  %v857 = vpop.f32.mrb[0].mxu0
  %v858 = vadd.f32 %v639, %v857
  %v859 = vpop.f32.mrb[0].mxu0
  %860 = vmatprep.mubr.f32.mxu0 0.0
  %861 = vmatmul.mubr.f32.gmra.mrb[0].mxu0 %v617
  %v862 = vpop.f32.mrb[0].mxu0
  %v863 = vadd.f32 %v639, %v862
  %v864 = vpop.f32.mrb[0].mxu0
  %865 = vdwg.mxu0
  %v866 = vtanh.pop %v708
  %v867 = vtanh.pop %v713
  %v868 = vtanh.pop %v718
  %v869 = vtanh.pop %v723
  %v870 = vtanh.pop %v728
  %v871 = vtanh.pop %v733
  %v872 = vtanh.pop %v738
  %v873 = vtanh.pop %v743
  %v874 = vtanh.pop %v748
  %v875 = vtanh.pop %v753
  %v876 = vtanh.pop %v758
  %v877 = vtanh.pop %v763
  %v878 = vtanh.pop %v768
  %v879 = vtanh.pop %v773
  %v880 = vtanh.pop %v778
  %v881 = vtanh.pop %v783
  %v882 = vtanh.pop %v788
  %v883 = vtanh.pop %v793
  %v884 = vtanh.pop %v798
  %v885 = vtanh.pop %v803
  %v886 = vtanh.pop %v808
  %v887 = vtanh.pop %v813
  %v888 = vtanh.pop %v818
  %v889 = vtanh.pop %v823
  %v890 = vtanh.pop %v828
  %v891 = vtanh.pop %v833
  %v892 = vtanh.pop %v838
  %v893 = vtanh.pop %v843
  %v894 = vtanh.pop %v848
  %v895 = vtanh.pop %v853
  %v896 = vtanh.pop %v858
  %v897 = vtanh.pop %v863
  %898 = vst [vmem:[%s7] sm:$0xff] %v866
  %899 = vst [vmem:[%s7 + $0x8] sm:$0xff] %v867
  %900 = vst [vmem:[%s7 + $0x10] sm:$0xff] %v868
  %901 = vst [vmem:[%s7 + $0x18] sm:$0xff] %v869
  %902 = vst [vmem:[%s7 + $0x20] sm:$0xff] %v870
  %903 = vst [vmem:[%s7 + $0x28] sm:$0xff] %v871
  %904 = vst [vmem:[%s7 + $0x30] sm:$0xff] %v872
  %905 = vst [vmem:[%s7 + $0x38] sm:$0xff] %v873
  %906 = vst [vmem:[%s7 + $0x40] sm:$0xff] %v874
  %907 = vst [vmem:[%s7 + $0x48] sm:$0xff] %v875
  %908 = vst [vmem:[%s7 + $0x50] sm:$0xff] %v876
  %909 = vst [vmem:[%s7 + $0x58] sm:$0xff] %v877
  %910 = vst [vmem:[%s7 + $0x60] sm:$0xff] %v878
  %911 = vst [vmem:[%s7 + $0x68] sm:$0xff] %v879
  %912 = vst [vmem:[%s7 + $0x70] sm:$0xff] %v880
  %913 = vst [vmem:[%s7 + $0x78] sm:$0xff] %v881
  %914 = vst [vmem:[%s7 + $0x80] sm:$0xff] %v882
  %915 = vst [vmem:[%s7 + $0x88] sm:$0xff] %v883
  %916 = vst [vmem:[%s7 + $0x90] sm:$0xff] %v884
  %917 = vst [vmem:[%s7 + $0x98] sm:$0xff] %v885
  %918 = vst [vmem:[%s7 + $0xa0] sm:$0xff] %v886
  %919 = vst [vmem:[%s7 + $0xa8] sm:$0xff] %v887
  %920 = vst [vmem:[%s7 + $0xb0] sm:$0xff] %v888
  %921 = vst [vmem:[%s7 + $0xb8] sm:$0xff] %v889
  %922 = vst [vmem:[%s7 + $0xc0] sm:$0xff] %v890
  %923 = vst [vmem:[%s7 + $0xc8] sm:$0xff] %v891
  %924 = vst [vmem:[%s7 + $0xd0] sm:$0xff] %v892
  %925 = vst [vmem:[%s7 + $0xd8] sm:$0xff] %v893
  %926 = vst [vmem:[%s7 + $0xe0] sm:$0xff] %v894
  %927 = vst [vmem:[%s7 + $0xe8] sm:$0xff] %v895
  %928 = vst [vmem:[%s7 + $0xf0] sm:$0xff] %v896
  %929 = vst [vmem:[%s7 + $0xf8] sm:$0xff] %v897
  // Predicated region
  $region30: #{actor_forward.1} parent=0 // pred_check
    _
  $region31: #{actor_forward.1} parent=0 // pred_check_branch
    %931 = sbr.rel (0) target = $region33
  $region32: #{actor_forward.1} parent=0 // pred_region
    _
  $region33: #{actor_forward.1} parent=0 // pred_fallthru
    _
  // Predicated region
  $region34: #{actor_forward.1} parent=0 // pred_check
    _
  $region35: #{actor_forward.1} parent=0 // pred_check_branch
    %933 = sbr.rel (0) target = $region37
  $region36: #{actor_forward.1} parent=0 // pred_region
    _
  $region37: #{actor_forward.1} parent=0 // pred_fallthru
    _

</llo_original>
